<compile_context>
chip_gen: v5e
topology: v5e:2x2
jax: 0.10.0
libtpu: 0.0.40
codegen_flags: <defaults>
</compile_context>

<pallas_src>
import jax
import jax.numpy as jnp
from jax.experimental import pallas as pl
from jax.experimental.pallas import tpu as pltpu


# ----------------------------------------------------------------------------
# Hardware-aware sizing helpers.
# ----------------------------------------------------------------------------
def _tpu_vmem_capacity_bytes():
    """Physical per-core VMEM; conservative (v7x-sized) fallback on failure."""
    try:
        return int(pltpu.get_tpu_info().vmem_capacity_bytes)
    except Exception:
        return 64 * 1024 * 1024


def _largest_divisor(n, cap, multiple_of=1):
    """Largest d with d | n, d <= cap, multiple_of | d.  None if no such d."""
    cap = max(min(cap, n), 1)
    for d in range(cap, 0, -1):
        if n % d == 0 and d % multiple_of == 0:
            return d
    return None


def _pick_fused_bt(B, row_bytes, budget):
    """Batch rows per fused step: fit the budget, keep >=2 (ideally >=4) grid
    steps for DMA/compute overlap and v7x's two TensorCores."""
    cap = max(budget // row_bytes, 1)
    min_rows = max((2 * 1024 * 1024 + row_bytes - 1) // row_bytes, 1)  # ~2 MiB blocks
    cap = min(cap, max(B // 4, min_rows))
    if B >= 2:
        cap = min(cap, B // 2)          # >=2 steps on the parallel axis (v7x)
    return _largest_divisor(B, max(cap, 1))


def _pick_stream_tiles(B, C, HW, itemsize, budget):
    """(bt, hwt) for the HW-tiled passes.  HW must be a multiple of 128."""
    lane_bytes = C * itemsize
    hwt = _largest_divisor(HW, max(budget // lane_bytes, 128), multiple_of=128)
    if hwt is None:
        hwt = HW
    bt_cap = max(B // 2, 1) if B >= 2 else 1   # >=2 parallel steps over batch
    bt = _largest_divisor(B, max(min(budget // (lane_bytes * hwt), bt_cap), 1))
    return bt, hwt


# ----------------------------------------------------------------------------
# Fused single-pass kernel: whole (C, HW) slab(s) per step.
# ----------------------------------------------------------------------------
def _ca_fused_kernel(x_ref, w1t_ref, b1_ref, w2t_ref, b2_ref, o_ref):
    # Pool pass (f32 accumulation).
    y = jnp.mean(x_ref[...], axis=-1, dtype=jnp.float32)                # (Bt, C)
    h = jnp.maximum(
        jnp.dot(y, w1t_ref[...], preferred_element_type=jnp.float32)
        + b1_ref[...], 0.0)                                             # (Bt, Cr)
    s = jax.nn.sigmoid(
        jnp.dot(h, w2t_ref[...], preferred_element_type=jnp.float32)
        + b2_ref[...])                                                  # (Bt, C)
    # Re-read x_ref for the rescale instead of keeping the multi-MiB tile live
    # across the squeeze/excite (avoids vreg/VMEM spill traffic).
    o_ref[...] = x_ref[...] * s.astype(x_ref.dtype)[:, :, None]


def _ca_fused(x_flat, w1t, b1r, w2t, b2r, bt, vmem_limit_bytes):
    B, C, HW = x_flat.shape
    Cr = w1t.shape[1]
    return pl.pallas_call(
        _ca_fused_kernel,
        out_shape=jax.ShapeDtypeStruct((B, C, HW), x_flat.dtype),
        grid_spec=pltpu.PrefetchScalarGridSpec(
            num_scalar_prefetch=0,
            grid=(B // bt,),
            in_specs=[
                pl.BlockSpec((bt, C, HW), lambda b: (b, 0, 0)),
                pl.BlockSpec((C, Cr), lambda b: (0, 0)),
                pl.BlockSpec((1, Cr), lambda b: (0, 0)),
                pl.BlockSpec((Cr, C), lambda b: (0, 0)),
                pl.BlockSpec((1, C), lambda b: (0, 0)),
            ],
            out_specs=pl.BlockSpec((bt, C, HW), lambda b: (b, 0, 0)),
        ),
        compiler_params=pltpu.CompilerParams(
            dimension_semantics=("parallel",),
            vmem_limit_bytes=vmem_limit_bytes),
    )(x_flat, w1t, b1r, w2t, b2r)


# ----------------------------------------------------------------------------
# Two-pass path for large H*W: (1) reduce + squeeze/excite, (2) rescale.
# ----------------------------------------------------------------------------
def _ca_scale(x_flat, w1t, b1r, w2t, b2r, bt, hwt, true_hw, vmem_limit_bytes):
    B, C, HWp = x_flat.shape
    Cr = w1t.shape[1]
    inv_hw = 1.0 / float(true_hw)   # divide by TRUE spatial size (ignores pad)

    def kernel(x_ref, w1t_ref, b1_ref, w2t_ref, b2_ref, s_ref, acc_ref):
        hw_i = pl.program_id(1)

        @pl.when(hw_i == 0)
        def _():
            acc_ref[...] = jnp.zeros_like(acc_ref)

        acc_ref[...] += jnp.sum(x_ref[...], axis=-1, dtype=jnp.float32)

        @pl.when(hw_i == pl.num_programs(1) - 1)
        def _():
            y = acc_ref[...] * inv_hw                                   # (Bt, C)
            h = jnp.maximum(
                jnp.dot(y, w1t_ref[...], preferred_element_type=jnp.float32)
                + b1_ref[...], 0.0)                                     # (Bt, Cr)
            s_ref[...] = jax.nn.sigmoid(
                jnp.dot(h, w2t_ref[...], preferred_element_type=jnp.float32)
                + b2_ref[...])                                          # (Bt, C)

    return pl.pallas_call(
        kernel,
        out_shape=jax.ShapeDtypeStruct((B, C), jnp.float32),    # lane-dense 2-D scale
        grid_spec=pltpu.PrefetchScalarGridSpec(
            num_scalar_prefetch=0,
            grid=(B // bt, HWp // hwt),
            in_specs=[
                pl.BlockSpec((bt, C, hwt), lambda b, h: (b, 0, h)),
                pl.BlockSpec((C, Cr), lambda b, h: (0, 0)),
                pl.BlockSpec((1, Cr), lambda b, h: (0, 0)),
                pl.BlockSpec((Cr, C), lambda b, h: (0, 0)),
                pl.BlockSpec((1, C), lambda b, h: (0, 0)),
            ],
            out_specs=pl.BlockSpec((bt, C), lambda b, h: (b, 0)),
            scratch_shapes=[pltpu.VMEM((bt, C), jnp.float32)],
        ),
        compiler_params=pltpu.CompilerParams(
            dimension_semantics=("parallel", "arbitrary"),
            vmem_limit_bytes=vmem_limit_bytes),
    )(x_flat, w1t, b1r, w2t, b2r)


def _ca_rescale_kernel(x_ref, s_ref, o_ref):
    o_ref[...] = x_ref[...] * s_ref[...].astype(x_ref.dtype)[:, :, None]


def _ca_rescale(x_flat, s, bt, hwt, vmem_limit_bytes):
    B, C, HWp = x_flat.shape
    return pl.pallas_call(
        _ca_rescale_kernel,
        out_shape=jax.ShapeDtypeStruct((B, C, HWp), x_flat.dtype),
        grid_spec=pltpu.PrefetchScalarGridSpec(
            num_scalar_prefetch=0,
            grid=(B // bt, HWp // hwt),
            in_specs=[
                pl.BlockSpec((bt, C, hwt), lambda b, h: (b, 0, h)),
                pl.BlockSpec((bt, C), lambda b, h: (b, 0)),
            ],
            out_specs=pl.BlockSpec((bt, C, hwt), lambda b, h: (b, 0, h)),
        ),
        compiler_params=pltpu.CompilerParams(
            dimension_semantics=("parallel", "parallel"),
            vmem_limit_bytes=vmem_limit_bytes),
    )(x_flat, s)


# ----------------------------------------------------------------------------
# Public wrapper.
# ----------------------------------------------------------------------------
def ca_layer(x, w1, b1, w2, b2, *, vmem_limit_bytes=None, max_fused_row_bytes=None):
    """CALayer forward.  x: (B, C, H, W).  Weights in PyTorch Conv2d 1x1 layout:
    w1: (C//r, C), b1: (C//r,), w2: (C, C//r), b2: (C,)."""
    B, C, H, W = x.shape
    Cr = w1.shape[0]
    HW = H * W
    itemsize = x.dtype.itemsize

    # Generation-aware budgets.
    if vmem_limit_bytes is None:
        # ~96 MiB on v5e/v6e (128 MiB physical), ~48 MiB on v7x (64 MiB physical).
        vmem_limit_bytes = (_tpu_vmem_capacity_bytes() * 3) // 4
    weight_bytes = sum(int(a.size) * a.dtype.itemsize for a in (w1, b1, w2, b2))
    avail = max(vmem_limit_bytes - weight_bytes - (2 << 20), 4 << 20)
    fused_budget = avail // 4      # fused path: in + out, each double-buffered
    scale_budget = avail // 2      # pass 1: pure input stream -> 2x bigger tiles
    rescale_budget = avail // 4    # pass 2: in + out, double-buffered
    if max_fused_row_bytes is None:
        max_fused_row_bytes = fused_budget

    x_flat = x.reshape(B, C, HW)
    w1t = w1.T                     # (C, Cr)
    w2t = w2.T                     # (Cr, C)
    b1r = b1.reshape(1, Cr)
    b2r = b2.reshape(1, C)

    row_bytes = C * HW * itemsize

    if row_bytes <= max_fused_row_bytes:
        # Fused single-pass (2x HBM traffic): pack batch rows per step within
        # budget while keeping multiple grid steps for pipelining / both TCs.
        bt = _pick_fused_bt(B, row_bytes, fused_budget)
        out = _ca_fused(x_flat, w1t, b1r, w2t, b2r, bt, vmem_limit_bytes)
        return out.reshape(B, C, H, W)

    # Two-pass path (3x HBM traffic) for images too large to fuse.
    # Lane-align HW by zero-padding to a multiple of 128; the pad doesn't
    # change the pooled sum and the mean divides by the true HW.
    # TODO(synk): replace pad/slice with a masked ragged last HW tile to avoid
    # the extra pad/slice copies when HW is not a multiple of 128.
    if HW % 128 != 0:
        x_work = jnp.pad(x_flat, ((0, 0), (0, 0), (0, 128 - HW % 128)))
    else:
        x_work = x_flat
    HWp = x_work.shape[-1]

    bt1, hwt1 = _pick_stream_tiles(B, C, HWp, itemsize, scale_budget)
    s = _ca_scale(x_work, w1t, b1r, w2t, b2r, bt1, hwt1, HW, vmem_limit_bytes)

    bt2, hwt2 = _pick_stream_tiles(B, C, HWp, itemsize, rescale_budget)
    out = _ca_rescale(x_work, s, bt2, hwt2, vmem_limit_bytes)
    if HWp != HW:
        out = out[:, :, :HW]
    return out.reshape(B, C, H, W)


def ca_layer_ref(x, w1, b1, w2, b2):
    """Plain-JAX reference matching the PyTorch forward."""
    y = jnp.mean(x, axis=(2, 3), keepdims=True)                 # (B, C, 1, 1)
    y = jnp.einsum('oc,bcij->boij', w1, y) + b1[None, :, None, None]
    y = jnp.maximum(y, 0.0)
    y = jnp.einsum('oc,bcij->boij', w2, y) + b2[None, :, None, None]
    y = jax.nn.sigmoid(y)
    return x * y


if __name__ == "__main__":
    B, C, H, W = 2, 64, 16, 16
    reduction = 16
    Cr = C // reduction

    key = jax.random.PRNGKey(0)
    k_x, k_w1, k_b1, k_w2, k_b2, k_x2, k_x3 = jax.random.split(key, 7)

    x = jax.random.normal(k_x, (B, C, H, W), dtype=jnp.float32)
    w1 = 0.1 * jax.random.normal(k_w1, (Cr, C), dtype=jnp.float32)
    b1 = 0.1 * jax.random.normal(k_b1, (Cr,), dtype=jnp.float32)
    w2 = 0.1 * jax.random.normal(k_w2, (C, Cr), dtype=jnp.float32)
    b2 = 0.1 * jax.random.normal(k_b2, (C,), dtype=jnp.float32)

    # Fused single-pass path.
    out = ca_layer(x, w1, b1, w2, b2)
    jax.block_until_ready(out)
    ref = ca_layer_ref(x, w1, b1, w2, b2)
    assert out.shape == (B, C, H, W)
    assert jnp.allclose(out, ref, atol=1e-5, rtol=1e-5), "fused path mismatch"

    # Two-pass HW-tiled path (forced by a tiny fused-row threshold).
    x2 = jax.random.normal(k_x2, (2, 64, 32, 32), dtype=jnp.float32)
    out2 = ca_layer(x2, w1, b1, w2, b2, max_fused_row_bytes=64 * 1024)
    jax.block_until_ready(out2)
    ref2 = ca_layer_ref(x2, w1, b1, w2, b2)
    assert jnp.allclose(out2, ref2, atol=1e-5, rtol=1e-5), "tiled path mismatch"

    # Two-pass path with HW not a multiple of 128 (exercises lane padding).
    x3 = jax.random.normal(k_x3, (2, 64, 24, 20), dtype=jnp.float32)
    out3 = ca_layer(x3, w1, b1, w2, b2, max_fused_row_bytes=64 * 1024)
    jax.block_until_ready(out3)
    ref3 = ca_layer_ref(x3, w1, b1, w2, b2)
    assert jnp.allclose(out3, ref3, atol=1e-5, rtol=1e-5), "padded tiled path mismatch"

    print("KERNEL_OK")
</pallas_src>

<mosaic_0001>
module attributes {stable_mosaic.version = 11 : i64} {
  func.func @_ca_fused_kernel(%arg0: i32, %arg1: memref<1x64x256xf32, #tpu.memory_space<vmem>>, %arg2: memref<64x4xf32, #tpu.memory_space<vmem>>, %arg3: memref<1x4xf32, #tpu.memory_space<vmem>>, %arg4: memref<4x64xf32, #tpu.memory_space<vmem>>, %arg5: memref<1x64xf32, #tpu.memory_space<vmem>>, %arg6: memref<1x64x256xf32, #tpu.memory_space<vmem>>) attributes {dimension_semantics = [#tpu.dimension_semantics<parallel>], iteration_bounds = array<i64: 2>, scalar_prefetch = 0 : i64, scratch_operands = 0 : i64, tpu.core_type = #tpu.core_type<tc>, window_params = [{transform_indices = @transform_0, window_bounds = array<i64: 1, 64, 256>}, {pipeline_mode = #tpu.pipeline_mode<synchronous>, transform_indices = @transform_1, window_bounds = array<i64: 64, 4>}, {pipeline_mode = #tpu.pipeline_mode<synchronous>, transform_indices = @transform_2, window_bounds = array<i64: 1, 4>}, {pipeline_mode = #tpu.pipeline_mode<synchronous>, transform_indices = @transform_3, window_bounds = array<i64: 4, 64>}, {pipeline_mode = #tpu.pipeline_mode<synchronous>, transform_indices = @transform_4, window_bounds = array<i64: 1, 64>}, {transform_indices = @transform_5, window_bounds = array<i64: 1, 64, 256>}]} {
    %c0 = arith.constant 0 : index
    %c0_0 = arith.constant 0 : index
    %c0_1 = arith.constant 0 : index
    %0 = vector.load %arg1[%c0, %c0_0, %c0_1] : memref<1x64x256xf32, #tpu.memory_space<vmem>>, vector<1x64x256xf32>
    %cst = arith.constant dense<0.000000e+00> : vector<1x64xf32>
    %1 = vector.multi_reduction <add>, %0, %cst [2] : vector<1x64x256xf32> to vector<1x64xf32>
    %cst_2 = arith.constant 2.560000e+02 : f32
    %2 = vector.broadcast %cst_2 : f32 to vector<1x64xf32>
    %3 = arith.divf %1, %2 : vector<1x64xf32>
    %c0_3 = arith.constant 0 : index
    %c0_4 = arith.constant 0 : index
    %4 = vector.load %arg2[%c0_3, %c0_4] : memref<64x4xf32, #tpu.memory_space<vmem>>, vector<64x4xf32>
    %cst_5 = arith.constant dense<0.000000e+00> : vector<1x4xf32>
    %5 = tpu.matmul %3, %4, %cst_5 {dimension_numbers = #tpu.dot_dimension_numbers<[1], [0], [0], [1], [0, 0, 1, 1], [], []>} : vector<1x64xf32>, vector<64x4xf32>, vector<1x4xf32> -> vector<1x4xf32>
    %c0_6 = arith.constant 0 : index
    %c0_7 = arith.constant 0 : index
    %6 = vector.load %arg3[%c0_6, %c0_7] : memref<1x4xf32, #tpu.memory_space<vmem>>, vector<1x4xf32>
    %7 = arith.addf %5, %6 : vector<1x4xf32>
    %cst_8 = arith.constant 0.000000e+00 : f32
    %8 = vector.broadcast %cst_8 : f32 to vector<1x4xf32>
    %9 = arith.maximumf %7, %8 : vector<1x4xf32>
    %c0_9 = arith.constant 0 : index
    %c0_10 = arith.constant 0 : index
    %10 = vector.load %arg4[%c0_9, %c0_10] : memref<4x64xf32, #tpu.memory_space<vmem>>, vector<4x64xf32>
    %cst_11 = arith.constant dense<0.000000e+00> : vector<1x64xf32>
    %11 = tpu.matmul %9, %10, %cst_11 {dimension_numbers = #tpu.dot_dimension_numbers<[1], [0], [0], [1], [0, 0, 1, 1], [], []>} : vector<1x4xf32>, vector<4x64xf32>, vector<1x64xf32> -> vector<1x64xf32>
    %c0_12 = arith.constant 0 : index
    %c0_13 = arith.constant 0 : index
    %12 = vector.load %arg5[%c0_12, %c0_13] : memref<1x64xf32, #tpu.memory_space<vmem>>, vector<1x64xf32>
    %13 = arith.addf %11, %12 : vector<1x64xf32>
    %14 = arith.negf %13 : vector<1x64xf32>
    %15 = math.exp %14 : vector<1x64xf32>
    %cst_14 = arith.constant 1.000000e+00 : f32
    %16 = vector.broadcast %cst_14 : f32 to vector<1x64xf32>
    %17 = arith.addf %16, %15 : vector<1x64xf32>
    %18 = arith.divf %16, %17 : vector<1x64xf32>
    %c0_15 = arith.constant 0 : index
    %c0_16 = arith.constant 0 : index
    %c0_17 = arith.constant 0 : index
    %19 = vector.load %arg1[%c0_15, %c0_16, %c0_17] : memref<1x64x256xf32, #tpu.memory_space<vmem>>, vector<1x64x256xf32>
    %20 = vector.shape_cast %18 : vector<1x64xf32> to vector<1x64x1xf32>
    %21 = vector.broadcast %20 : vector<1x64x1xf32> to vector<1x64x256xf32>
    %22 = arith.mulf %19, %21 : vector<1x64x256xf32>
    %c0_18 = arith.constant 0 : index
    %c0_19 = arith.constant 0 : index
    %c0_20 = arith.constant 0 : index
    %23 = vector.load %arg6[%c0_18, %c0_19, %c0_20] : memref<1x64x256xf32, #tpu.memory_space<vmem>>, vector<1x64x256xf32>
    tpu.vector_store %arg6[%c0_18, %c0_19, %c0_20], %22 {strides = array<i32>} : memref<1x64x256xf32, #tpu.memory_space<vmem>>, vector<1x64x256xf32>,
    return
  }
  func.func @transform_0(%arg0: i32) -> (i32, i32, i32) {
    %c0_i32 = arith.constant 0 : i32
    %c0_i32_0 = arith.constant 0 : i32
    %c0_i32_1 = arith.constant 0 : i32
    return %arg0, %c0_i32, %c0_i32_0 : i32, i32, i32
  }
  func.func @transform_1(%arg0: i32) -> (i32, i32) {
    %c0_i32 = arith.constant 0 : i32
    %c0_i32_0 = arith.constant 0 : i32
    %c0_i32_1 = arith.constant 0 : i32
    return %c0_i32, %c0_i32_0 : i32, i32
  }
  func.func @transform_2(%arg0: i32) -> (i32, i32) {
    %c0_i32 = arith.constant 0 : i32
    %c0_i32_0 = arith.constant 0 : i32
    %c0_i32_1 = arith.constant 0 : i32
    return %c0_i32, %c0_i32_0 : i32, i32
  }
  func.func @transform_3(%arg0: i32) -> (i32, i32) {
    %c0_i32 = arith.constant 0 : i32
    %c0_i32_0 = arith.constant 0 : i32
    %c0_i32_1 = arith.constant 0 : i32
    return %c0_i32, %c0_i32_0 : i32, i32
  }
  func.func @transform_4(%arg0: i32) -> (i32, i32) {
    %c0_i32 = arith.constant 0 : i32
    %c0_i32_0 = arith.constant 0 : i32
    %c0_i32_1 = arith.constant 0 : i32
    return %c0_i32, %c0_i32_0 : i32, i32
  }
  func.func @transform_5(%arg0: i32) -> (i32, i32, i32) {
    %c0_i32 = arith.constant 0 : i32
    %c0_i32_0 = arith.constant 0 : i32
    %c0_i32_1 = arith.constant 0 : i32
    return %arg0, %c0_i32, %c0_i32_0 : i32, i32, i32
  }
}

</mosaic_0001>

<llo_original>
// kernel: tpu_custom_call.1
$region0: #{tpu_custom_call.1}
  #allocation0 [shape = 'u32[]', space=smem, size = 0x4, offset = 0x4, fixed_abs, tag = 'smem constant byte address 0x4 - core index']
  #allocation1 [shape = 'u32[72,128]{1,0:T(1,128)}', space=vmem, size = 0x9000, scoped, tag = 'internal scratch']
  %s0 = inlined_call_operand.hbm [shape: f32[2,64,256], index: 0, kind: input, shape index: {}]
  %s1 = inlined_call_operand.vmem [shape: f32[64,4], index: 1, kind: input, shape index: {}]
  %s2 = inlined_call_operand.vmem [shape: f32[1,4], index: 2, kind: input, shape index: {}]
  %s3 = inlined_call_operand.vmem [shape: f32[4,64], index: 3, kind: input, shape index: {}]
  %s4 = inlined_call_operand.vmem [shape: f32[1,64], index: 4, kind: input, shape index: {}]
  %s5 = inlined_call_operand.hbm [shape: f32[2,64,256], index: 5, kind: output, shape index: {}]
  %s6 = sld [smem:[#allocation0]]
  $region57: #{tpu_custom_call.1} parent=0
    _
  %s8 = ssub.s32 1, %s6
  %s9 = scalar_select 0, %s8, %s6
  $region1: #{tpu_custom_call.1} parent=0
    #allocation2 [shape = 'u8[131072]{0}', space=vmem, size = 0x20000, scoped, tag = 'input window, operand 0']
    #allocation3 [shape = 's32[2]{0}', space=sflag, size = 0x8, scoped, tag = 'scoped memory for tpu_custom_call.1']
    #allocation4 [shape = 's32[2]{0}', space=sflag, size = 0x8, scoped, tag = 'scoped memory for tpu_custom_call.1']
    #allocation5 [shape = 'u8[131072]{0}', space=vmem, size = 0x20000, scoped, tag = 'output window, operand 0']
    %10 = vsyncpa [#allocation3], 0
    %s11 = scalar_lea.sflag [#allocation3], 1
    %12 = vsyncpa %s11, 0
    %13 = vsyncpa [#allocation4], 0
    %s14 = scalar_lea.sflag [#allocation4], 1
    %15 = vsyncpa %s14, 0
    loop: start=0, step=1, limit=4
    $region2: #{tpu_custom_call.1} parent=1 // loop_pre_header
      _
    $region3: #{tpu_custom_call.1} parent=1 // loop_header
      %s17 = sphi 0, %s21
      %p18 = scmp.ge.s32.totalorder %s17, 4
      %s27 = sphi 0, %s29
      %s30 = sphi 0, %s27
      %s31 = sphi 0, %s30
      %s47 = sphi 0, %s31
      %s51 = sphi 0, %s51
      %s53 = sphi 0, %s51
      %s54 = sphi 0, %s53
      %s68 = sphi 0, %s54
      %s72 = sphi 0, %s72
      %s74 = sphi 0, %s72
      %s75 = sphi 0, %s74
      %s89 = sphi 0, %s75
      %s93 = sphi 0, %s93
      %s95 = sphi 0, %s93
      %s96 = sphi 0, %s95
      %s110 = sphi 0, %s96
      %s114 = sphi 0, %s114
      %s116 = sphi 0, %s114
      %s117 = sphi 0, %s116
      %s131 = sphi 0, %s117
      %s137 = sphi 0, %s139
      %s140 = sphi 0, %s137
      %s141 = sphi 0, %s140
      %s157 = sphi 0, %s141
    $region4: #{tpu_custom_call.1} parent=1 // loop_header_branch
      %20 = sbr.rel (%p18) target = $region8
    $region5: #{tpu_custom_call.1} parent=1 // loop_body
      %s22 = ssub.s32 %s17, 1
      %s23 = ssub.s32 %s17, 2
      %s24 = sadd.s32 %s17, 1
      %s25 = ssub.s32 %s17, %s24
      %p26 = scmp.eq.s32.totalorder %s25, 0
      %s28 = sadd.s32 %s27, 1
      %s29 = scalar_select %p26, %s27, %s28
      %p32 = pneg %p26
      %p33 = scmp.eq.s32.totalorder %s17, 1
      %p34 = por %p32, %p33
      %p35 = scmp.ne.s32.totalorder %s27, %s30
      %p36 = scmp.eq.s32.totalorder %s17, 0
      %p37 = por %p35, %p36
      %p38 = scmp.ne.s32.totalorder %s27, %s30
      %p39 = scmp.eq.s32.totalorder %s22, 1
      %p40 = por %p38, %p39
      %p41 = scmp.ne.s32.totalorder %s30, %s31
      %p42 = scmp.eq.s32.totalorder %s22, 0
      %p43 = por %p41, %p42
      %p44 = scmp.ne.s32.totalorder %s30, %s31
      %p45 = scmp.eq.s32.totalorder %s23, 1
      %p46 = por %p44, %p45
      %p48 = scmp.ne.s32.totalorder %s31, %s47
      %p49 = scmp.eq.s32.totalorder %s23, 0
      %p50 = por %p48, %p49
      %s52 = sadd.s32 %s51, 1
      %p55 = scmp.eq.s32.totalorder %s17, 1
      %p56 = scmp.ne.s32.totalorder %s51, %s53
      %p57 = scmp.eq.s32.totalorder %s17, 0
      %p58 = por %p56, %p57
      %p59 = scmp.ne.s32.totalorder %s51, %s53
      %p60 = scmp.eq.s32.totalorder %s22, 1
      %p61 = por %p59, %p60
      %p62 = scmp.ne.s32.totalorder %s53, %s54
      %p63 = scmp.eq.s32.totalorder %s22, 0
      %p64 = por %p62, %p63
      %p65 = scmp.ne.s32.totalorder %s53, %s54
      %p66 = scmp.eq.s32.totalorder %s23, 1
      %p67 = por %p65, %p66
      %p69 = scmp.ne.s32.totalorder %s54, %s68
      %p70 = scmp.eq.s32.totalorder %s23, 0
      %p71 = por %p69, %p70
      %s73 = sadd.s32 %s72, 1
      %p76 = scmp.eq.s32.totalorder %s17, 1
      %p77 = scmp.ne.s32.totalorder %s72, %s74
      %p78 = scmp.eq.s32.totalorder %s17, 0
      %p79 = por %p77, %p78
      %p80 = scmp.ne.s32.totalorder %s72, %s74
      %p81 = scmp.eq.s32.totalorder %s22, 1
      %p82 = por %p80, %p81
      %p83 = scmp.ne.s32.totalorder %s74, %s75
      %p84 = scmp.eq.s32.totalorder %s22, 0
      %p85 = por %p83, %p84
      %p86 = scmp.ne.s32.totalorder %s74, %s75
      %p87 = scmp.eq.s32.totalorder %s23, 1
      %p88 = por %p86, %p87
      %p90 = scmp.ne.s32.totalorder %s75, %s89
      %p91 = scmp.eq.s32.totalorder %s23, 0
      %p92 = por %p90, %p91
      %s94 = sadd.s32 %s93, 1
      %p97 = scmp.eq.s32.totalorder %s17, 1
      %p98 = scmp.ne.s32.totalorder %s93, %s95
      %p99 = scmp.eq.s32.totalorder %s17, 0
      %p100 = por %p98, %p99
      %p101 = scmp.ne.s32.totalorder %s93, %s95
      %p102 = scmp.eq.s32.totalorder %s22, 1
      %p103 = por %p101, %p102
      %p104 = scmp.ne.s32.totalorder %s95, %s96
      %p105 = scmp.eq.s32.totalorder %s22, 0
      %p106 = por %p104, %p105
      %p107 = scmp.ne.s32.totalorder %s95, %s96
      %p108 = scmp.eq.s32.totalorder %s23, 1
      %p109 = por %p107, %p108
      %p111 = scmp.ne.s32.totalorder %s96, %s110
      %p112 = scmp.eq.s32.totalorder %s23, 0
      %p113 = por %p111, %p112
      %s115 = sadd.s32 %s114, 1
      %p118 = scmp.eq.s32.totalorder %s17, 1
      %p119 = scmp.ne.s32.totalorder %s114, %s116
      %p120 = scmp.eq.s32.totalorder %s17, 0
      %p121 = por %p119, %p120
      %p122 = scmp.ne.s32.totalorder %s114, %s116
      %p123 = scmp.eq.s32.totalorder %s22, 1
      %p124 = por %p122, %p123
      %p125 = scmp.ne.s32.totalorder %s116, %s117
      %p126 = scmp.eq.s32.totalorder %s22, 0
      %p127 = por %p125, %p126
      %p128 = scmp.ne.s32.totalorder %s116, %s117
      %p129 = scmp.eq.s32.totalorder %s23, 1
      %p130 = por %p128, %p129
      %p132 = scmp.ne.s32.totalorder %s117, %s131
      %p133 = scmp.eq.s32.totalorder %s23, 0
      %p134 = por %p132, %p133
      %s135 = ssub.s32 %s17, %s24
      %p136 = scmp.eq.s32.totalorder %s135, 0
      %s138 = sadd.s32 %s137, 1
      %s139 = scalar_select %p136, %s137, %s138
      %p142 = pneg %p136
      %p143 = scmp.eq.s32.totalorder %s17, 1
      %p144 = por %p142, %p143
      %p145 = scmp.ne.s32.totalorder %s137, %s140
      %p146 = scmp.eq.s32.totalorder %s17, 0
      %p147 = por %p145, %p146
      %p148 = scmp.ne.s32.totalorder %s137, %s140
      %p149 = scmp.eq.s32.totalorder %s22, 1
      %p150 = por %p148, %p149
      %p151 = scmp.ne.s32.totalorder %s140, %s141
      %p152 = scmp.eq.s32.totalorder %s22, 0
      %p153 = por %p151, %p152
      %p154 = scmp.ne.s32.totalorder %s140, %s141
      %p155 = scmp.eq.s32.totalorder %s23, 1
      %p156 = por %p154, %p155
      %p158 = scmp.ne.s32.totalorder %s141, %s157
      %p159 = scmp.eq.s32.totalorder %s23, 0
      %p160 = por %p158, %p159
      %p161 = scmp.le.s32.totalorder 1, %s17
      %p162 = scmp.lt.s32.totalorder %s17, 3
      %p163 = pnand %p161, %p162
      %p164 = pneg %p163
      // Predicated region
      $region9: #{tpu_custom_call.1} parent=5 // pred_check
        _
      $region10: #{tpu_custom_call.1} parent=5 // pred_check_branch
        %166 = sbr.rel (%p163) target = $region12
      $region11: #{tpu_custom_call.1} parent=5 // pred_region
        %s167 = ssub.s32 %s17, 1
        // Predicated region
        $region13: #{tpu_custom_call.1} parent=11 // pred_check
          %p168 = pneg %p64
        $region14: #{tpu_custom_call.1} parent=11 // pred_check_branch
          %170 = sbr.rel (%p168) target = $region16
        $region15: #{tpu_custom_call.1} parent=11 // pred_region
          _
        $region16: #{tpu_custom_call.1} parent=11 // pred_fallthru
          _
        // Predicated region
        $region17: #{tpu_custom_call.1} parent=11 // pred_check
          %p171 = pneg %p85
        $region18: #{tpu_custom_call.1} parent=11 // pred_check_branch
          %173 = sbr.rel (%p171) target = $region20
        $region19: #{tpu_custom_call.1} parent=11 // pred_region
          _
        $region20: #{tpu_custom_call.1} parent=11 // pred_fallthru
          _
        // Predicated region
        $region21: #{tpu_custom_call.1} parent=11 // pred_check
          %p174 = pneg %p106
        $region22: #{tpu_custom_call.1} parent=11 // pred_check_branch
          %176 = sbr.rel (%p174) target = $region24
        $region23: #{tpu_custom_call.1} parent=11 // pred_region
          _
        $region24: #{tpu_custom_call.1} parent=11 // pred_fallthru
          _
        // Predicated region
        $region25: #{tpu_custom_call.1} parent=11 // pred_check
          %p177 = pneg %p127
        $region26: #{tpu_custom_call.1} parent=11 // pred_check_branch
          %179 = sbr.rel (%p177) target = $region28
        $region27: #{tpu_custom_call.1} parent=11 // pred_region
          _
        $region28: #{tpu_custom_call.1} parent=11 // pred_fallthru
          _
      $region12: #{tpu_custom_call.1} parent=5 // pred_fallthru
        _
      %p180 = scmp.lt.s32.totalorder %s17, 2
      // Predicated region
      $region29: #{tpu_custom_call.1} parent=5 // pred_check
        %p181 = pneg %p180
      $region30: #{tpu_custom_call.1} parent=5 // pred_check_branch
        %183 = sbr.rel (%p181) target = $region32
      $region31: #{tpu_custom_call.1} parent=5 // pred_region
        // Predicated region
        $region33: #{tpu_custom_call.1} parent=31 // pred_check
          %p184 = pneg %p37
        $region34: #{tpu_custom_call.1} parent=31 // pred_check_branch
          %186 = sbr.rel (%p184) target = $region36
        $region35: #{tpu_custom_call.1} parent=31 // pred_region
          %s187 = sand.u32 %s27, 1
          %s188 = scalar_lea.sflag [#allocation3], %s187
          %s189 = sand.u32 %s27, 1
          %s190 = smul.addr %s189, 128
          %s191 = scalar_lea.vmem [#allocation2], %s190
          %193 = vsyncadd %s188, 0
          %s194 = smul.addr %s17, 16
          %s195 = smul.addr %s194, 8
          %s196 = scalar_lea.hbm %s0, %s195
          %s197 = sshll.u32 %s196, 4
          %s198 = int_to_ptr.hbm [resolvable:$true] %s197
          %s199 = sshll.u32 %s191, 4
          %s200 = int_to_ptr.vmem [resolvable:$true] %s199
          %205 = dma.hbm_to_vmem [thread:$0]  %s198, 2048, %s200, %s188, 256, 256, 16
        $region36: #{tpu_custom_call.1} parent=31 // pred_fallthru
          _
      $region32: #{tpu_custom_call.1} parent=5 // pred_fallthru
        _
      %p206 = scmp.le.s32.totalorder 1, %s17
      %p207 = scmp.lt.s32.totalorder %s17, 3
      %p208 = pnand %p206, %p207
      %p209 = pneg %p208
      // Predicated region
      $region37: #{tpu_custom_call.1} parent=5 // pred_check
        _
      $region38: #{tpu_custom_call.1} parent=5 // pred_check_branch
        %211 = sbr.rel (%p208) target = $region40
      $region39: #{tpu_custom_call.1} parent=5 // pred_region
        %s212 = ssub.s32 %s17, 1
        %s213 = sand.u32 %s30, 1
        %s214 = scalar_lea.sflag [#allocation3], %s213
        %s215 = sand.u32 %s30, 1
        %s216 = smul.addr %s215, 128
        %s217 = scalar_lea.vmem [#allocation2], %s216
        // Predicated region
        $region41: #{tpu_custom_call.1} parent=39 // pred_check
          %p218 = pneg %p43
        $region42: #{tpu_custom_call.1} parent=39 // pred_check_branch
          %220 = sbr.rel (%p218) target = $region44
        $region43: #{tpu_custom_call.1} parent=39 // pred_region
          %222 = dma.done %s214, 2048
        $region44: #{tpu_custom_call.1} parent=39 // pred_fallthru
          _
        %s223 = sand.u32 %s30, 1
        %s224 = scalar_lea.sflag [#allocation3], %s223
        %s225 = sand.u32 %s30, 1
        %s226 = smul.addr %s225, 128
        %s227 = scalar_lea.vmem [#allocation2], %s226
        %p228 = pneg %p43
        %p229 = pneg %p40
        %p230 = pneg %p64
        %p231 = pneg %p61
        %p232 = pneg %p85
        %p233 = pneg %p82
        %p234 = pneg %p106
        %p235 = pneg %p103
        %p236 = pneg %p127
        %p237 = pneg %p124
        %p238 = pneg %p153
        %p239 = pneg %p150
        %s240 = sand.u32 %s140, 1
        %s241 = scalar_lea.sflag [#allocation4], %s240
        %s242 = sand.u32 %s140, 1
        %s243 = smul.addr %s242, 128
        %s244 = scalar_lea.vmem [#allocation5], %s243
        %v245 = vld [vmem:[%s217] sm:$0xff]
        %v246 = vld [vmem:[%s217 + $0x8] sm:$0xff]
        %v247 = vld [vmem:[%s217 + $0x10] sm:$0xff]
        %v248 = vld [vmem:[%s217 + $0x18] sm:$0xff]
        %v249 = vld [vmem:[%s217 + $0x20] sm:$0xff]
        %v250 = vld [vmem:[%s217 + $0x28] sm:$0xff]
        %v251 = vld [vmem:[%s217 + $0x30] sm:$0xff]
        %v252 = vld [vmem:[%s217 + $0x38] sm:$0xff]
        %v253 = vld [vmem:[%s217 + $0x40] sm:$0xff]
        %v254 = vld [vmem:[%s217 + $0x48] sm:$0xff]
        %v255 = vld [vmem:[%s217 + $0x50] sm:$0xff]
        %v256 = vld [vmem:[%s217 + $0x58] sm:$0xff]
        %v257 = vld [vmem:[%s217 + $0x60] sm:$0xff]
        %v258 = vld [vmem:[%s217 + $0x68] sm:$0xff]
        %v259 = vld [vmem:[%s217 + $0x70] sm:$0xff]
        %v260 = vld [vmem:[%s217 + $0x78] sm:$0xff]
        %v261 = vadd.f32 %v245, %v246
        %262 = vadd.xlane.f32.xlu0 %v261
        %v263 = vpop.xlane.xlu0 %262
        %v264 = vadd.f32 %v247, %v248
        %265 = vadd.xlane.f32.xlu0 %v264
        %v266 = vpop.xlane.xlu0 %265
        %v267 = vadd.f32 %v249, %v250
        %268 = vadd.xlane.f32.xlu0 %v267
        %v269 = vpop.xlane.xlu0 %268
        %v270 = vadd.f32 %v251, %v252
        %271 = vadd.xlane.f32.xlu0 %v270
        %v272 = vpop.xlane.xlu0 %271
        %v273 = vadd.f32 %v253, %v254
        %274 = vadd.xlane.f32.xlu0 %v273
        %v275 = vpop.xlane.xlu0 %274
        %v276 = vadd.f32 %v255, %v256
        %277 = vadd.xlane.f32.xlu0 %v276
        %v278 = vpop.xlane.xlu0 %277
        %v279 = vadd.f32 %v257, %v258
        %280 = vadd.xlane.f32.xlu0 %v279
        %v281 = vpop.xlane.xlu0 %280
        %v282 = vadd.f32 %v259, %v260
        %283 = vadd.xlane.f32.xlu0 %v282
        %v284 = vpop.xlane.xlu0 %283
        %v285 = vrcp.pop 256.0
        %v286 = vmul.f32 256.0, %v285
        %v287 = vsub.f32 1.0, %v286
        %v288 = vmul.f32 %v285, %v287
        %v289 = vadd.f32 %v285, %v288
        %vm290 = vweird.f32 %v285
        %v291 = vsel %vm290, %v285, %v289
        %v292 = vmul.f32 %v263, %v291
        %v293 = vmul.f32 %v266, %v291
        %v294 = vmul.f32 %v269, %v291
        %v295 = vmul.f32 %v272, %v291
        %v296 = vmul.f32 %v275, %v291
        %v297 = vmul.f32 %v278, %v291
        %v298 = vmul.f32 %v281, %v291
        %v299 = vmul.f32 %v284, %v291
        %v300 = vld [vmem:[%s1] sm:$0xff]
        %v301 = vld [vmem:[%s1 + $0x8] sm:$0xff]
        %v302 = vld [vmem:[%s1 + $0x10] sm:$0xff]
        %v303 = vld [vmem:[%s1 + $0x18] sm:$0xff]
        %v304 = vld [vmem:[%s1 + $0x20] sm:$0xff]
        %v305 = vld [vmem:[%s1 + $0x28] sm:$0xff]
        %v306 = vld [vmem:[%s1 + $0x30] sm:$0xff]
        %v307 = vld [vmem:[%s1 + $0x38] sm:$0xff]
        %v308 = vld [vmem:[%s2] sm:$0x1]
        %v317 = vlaneseq
        %v318 = vand.u32 %v317, 127
        %v319 = vperm.slane %v292, %v318
        %v320 = vadd.s32 %v318, 4294967288
        %v321 = vperm.slane %v293, %v320
        %vm322 = vcmask 130112
        %v323 = vsel %vm322, %v321, %v319
        %v324 = vadd.s32 %v318, 4294967280
        %v325 = vperm.slane %v294, %v324
        %vm326 = vcmask 195712
        %v327 = vsel %vm326, %v325, %v323
        %v328 = vadd.s32 %v318, 4294967272
        %v329 = vperm.slane %v295, %v328
        %vm330 = vcmask 261312
        %v331 = vsel %vm330, %v329, %v327
        %v332 = vadd.s32 %v318, 4294967264
        %v333 = vperm.slane %v296, %v332
        %vm334 = vcmask 326912
        %v335 = vsel %vm334, %v333, %v331
        %v336 = vadd.s32 %v318, 4294967256
        %v337 = vperm.slane %v297, %v336
        %vm338 = vcmask 392512
        %v339 = vsel %vm338, %v337, %v335
        %v340 = vadd.s32 %v318, 4294967248
        %v341 = vperm.slane %v298, %v340
        %vm342 = vcmask 458112
        %v343 = vsel %vm342, %v341, %v339
        %v344 = vadd.s32 %v318, 4294967240
        %v345 = vperm.slane %v299, %v344
        %vm346 = vcmask 523712
        %v347 = vsel %vm346, %v345, %v343
        %vm348 = vcmask 523264
        %v349 = vsel %vm348, %v347, 0
        %351 = vmatpush.msra.mxu0 0.0
        %352 = vmatpush.msra.mxu0 0.0
        %353 = vmatpush.msra.mxu0 0.0
        %354 = vmatpush.msra.mxu0 0.0
        %355 = vmatpush.msra.mxu0 0.0
        %356 = vmatpush.msra.mxu0 0.0
        %357 = vmatpush.msra.mxu0 0.0
        %358 = vmatpush.msra.mxu0 0.0
        %359 = vmatpush.msra.mxu0 %v307
        %360 = vmatpush.msra.mxu0 %v306
        %361 = vmatpush.msra.mxu0 %v305
        %362 = vmatpush.msra.mxu0 %v304
        %363 = vmatpush.msra.mxu0 %v303
        %364 = vmatpush.msra.mxu0 %v302
        %365 = vmatpush.msra.mxu0 %v301
        %366 = vmatpush.msra.mxu0 %v300
        %367 = vmatmul.f32.gmra.mxu0 %v349
        %v368 = vpop.f32.mrf.mxu0
        %v369 = vadd.f32 %v308, %v368
        %370 = vdwg.mxu0
        %v371 = vmax.f32 %v369, 0.0
        %v372 = vld [vmem:[%s3] sm:$0xf]
        %v373 = vld [vmem:[%s4] sm:$0x1]
        %vm374 = vcmask 31744
        %v376 = vsel %vm374, %v371, 0
        %vm378 = vcmask 1043456
        %v380 = vsel %vm378, %v372, 0
        %382 = vmatpush.msra.mxu0 0.0
        %383 = vmatpush.msra.mxu0 0.0
        %384 = vmatpush.msra.mxu0 0.0
        %385 = vmatpush.msra.mxu0 0.0
        %386 = vmatpush.msra.mxu0 0.0
        %387 = vmatpush.msra.mxu0 0.0
        %388 = vmatpush.msra.mxu0 0.0
        %389 = vmatpush.msra.mxu0 0.0
        %390 = vmatpush.msra.mxu0 0.0
        %391 = vmatpush.msra.mxu0 0.0
        %392 = vmatpush.msra.mxu0 0.0
        %393 = vmatpush.msra.mxu0 0.0
        %394 = vmatpush.msra.mxu0 0.0
        %395 = vmatpush.msra.mxu0 0.0
        %396 = vmatpush.msra.mxu0 0.0
        %397 = vmatpush.msra.mxu0 %v380
        %398 = vmatmul.f32.gmra.mxu0 %v376
        %v399 = vpop.f32.mrf.mxu0
        %v400 = vadd.f32 %v373, %v399
        %401 = vdwg.mxu0
        %v402 = vxor.u32 %v400, 2147483648
        %v403 = vmul.f32 %v402, 1.442695
        %v404 = vpow.pop %v403
        %v405 = vadd.f32 %v404, 1.0
        %v406 = vrcp.pop %v405
        %v407 = vmul.f32 %v405, %v406
        %v408 = vsub.f32 1.0, %v407
        %v409 = vmul.f32 %v406, %v408
        %v410 = vadd.f32 %v406, %v409
        %vm411 = vweird.f32 %v405
        %vm412 = vweird.f32 %v406
        %vm413 = vmor %vm411, %vm412
        %v414 = vsel %vm413, %v406, %v410
        %v415 = vand.u32 2147483647, %v405
        %vm416 = vcmp.eq.f32.partialorder %v415, 8.507059e+37
        %v417 = vand.u32 %v405, 2147483648
        %v418 = vor.u32 1.1754944e-38, %v417
        %v419 = vsel %vm416, %v418, %v414
        %v420 = vmul.f32 1.0, %v419
        %v421 = vperm.slane %v420, 0
        %v422 = vlaneseq
        %v423 = vshrl.u32 %v422, 7
        %425 = vset.pattern.permute.xlu0 %v423
        %426 = vperm.xlu0 %425, %v421
        %v427 = vpop.permute.xlu0 %426
        %v428 = vlaneseq
        %v429 = vshrl.u32 %v428, 7
        %v430 = vadd.s32 %v429, 8
        %431 = vset.pattern.permute.xlu0 %v430
        %432 = vperm.xlu0 %431, %v421
        %v433 = vpop.permute.xlu0 %432
        %v434 = vlaneseq
        %v435 = vshrl.u32 %v434, 7
        %v436 = vadd.s32 %v435, 16
        %437 = vset.pattern.permute.xlu0 %v436
        %438 = vperm.xlu0 %437, %v421
        %v439 = vpop.permute.xlu0 %438
        %v440 = vlaneseq
        %v441 = vshrl.u32 %v440, 7
        %v442 = vadd.s32 %v441, 24
        %443 = vset.pattern.permute.xlu0 %v442
        %444 = vperm.xlu0 %443, %v421
        %v445 = vpop.permute.xlu0 %444
        %v446 = vlaneseq
        %v447 = vshrl.u32 %v446, 7
        %v448 = vadd.s32 %v447, 32
        %449 = vset.pattern.permute.xlu0 %v448
        %450 = vperm.xlu0 %449, %v421
        %v451 = vpop.permute.xlu0 %450
        %v452 = vlaneseq
        %v453 = vshrl.u32 %v452, 7
        %v454 = vadd.s32 %v453, 40
        %455 = vset.pattern.permute.xlu0 %v454
        %456 = vperm.xlu0 %455, %v421
        %v457 = vpop.permute.xlu0 %456
        %v458 = vlaneseq
        %v459 = vshrl.u32 %v458, 7
        %v460 = vadd.s32 %v459, 48
        %461 = vset.pattern.permute.xlu0 %v460
        %462 = vperm.xlu0 %461, %v421
        %v463 = vpop.permute.xlu0 %462
        %v464 = vlaneseq
        %v465 = vshrl.u32 %v464, 7
        %v466 = vadd.s32 %v465, 56
        %467 = vset.pattern.permute.xlu0 %v466
        %468 = vperm.xlu0 %467, %v421
        %v469 = vpop.permute.xlu0 %468
        %v470 = vmul.f32 %v245, %v427
        %v471 = vmul.f32 %v246, %v427
        %v472 = vmul.f32 %v247, %v433
        %v473 = vmul.f32 %v248, %v433
        %v474 = vmul.f32 %v249, %v439
        %v475 = vmul.f32 %v250, %v439
        %v476 = vmul.f32 %v251, %v445
        %v477 = vmul.f32 %v252, %v445
        %v478 = vmul.f32 %v253, %v451
        %v479 = vmul.f32 %v254, %v451
        %v480 = vmul.f32 %v255, %v457
        %v481 = vmul.f32 %v256, %v457
        %v482 = vmul.f32 %v257, %v463
        %v483 = vmul.f32 %v258, %v463
        %v484 = vmul.f32 %v259, %v469
        %v485 = vmul.f32 %v260, %v469
        %486 = vst [vmem:[%s244] sm:$0xff] %v470
        %487 = vst [vmem:[%s244 + $0x8] sm:$0xff] %v471
        %488 = vst [vmem:[%s244 + $0x10] sm:$0xff] %v472
        %489 = vst [vmem:[%s244 + $0x18] sm:$0xff] %v473
        %490 = vst [vmem:[%s244 + $0x20] sm:$0xff] %v474
        %491 = vst [vmem:[%s244 + $0x28] sm:$0xff] %v475
        %492 = vst [vmem:[%s244 + $0x30] sm:$0xff] %v476
        %493 = vst [vmem:[%s244 + $0x38] sm:$0xff] %v477
        %494 = vst [vmem:[%s244 + $0x40] sm:$0xff] %v478
        %495 = vst [vmem:[%s244 + $0x48] sm:$0xff] %v479
        %496 = vst [vmem:[%s244 + $0x50] sm:$0xff] %v480
        %497 = vst [vmem:[%s244 + $0x58] sm:$0xff] %v481
        %498 = vst [vmem:[%s244 + $0x60] sm:$0xff] %v482
        %499 = vst [vmem:[%s244 + $0x68] sm:$0xff] %v483
        %500 = vst [vmem:[%s244 + $0x70] sm:$0xff] %v484
        %501 = vst [vmem:[%s244 + $0x78] sm:$0xff] %v485
        %s502 = sand.u32 %s140, 1
        %s503 = scalar_lea.sflag [#allocation4], %s502
        %s504 = sand.u32 %s140, 1
        %s505 = smul.addr %s504, 128
        %s506 = scalar_lea.vmem [#allocation5], %s505
        // Predicated region
        $region45: #{tpu_custom_call.1} parent=39 // pred_check
          %p507 = pneg %p150
        $region46: #{tpu_custom_call.1} parent=39 // pred_check_branch
          %509 = sbr.rel (%p507) target = $region48
        $region47: #{tpu_custom_call.1} parent=39 // pred_region
          %511 = vsyncadd %s503, 0
          %s512 = smul.addr %s22, 16
          %s513 = smul.addr %s512, 8
          %s514 = scalar_lea.hbm %s5, %s513
          %s515 = sshll.u32 %s506, 4
          %s516 = int_to_ptr.vmem [resolvable:$true] %s515
          %s517 = sshll.u32 %s514, 4
          %s518 = int_to_ptr.hbm [resolvable:$true] %s517
          %523 = dma.vmem_to_hbm [thread:$0]  %s516, 2048, %s518, %s503, 256, 256, 16
        $region48: #{tpu_custom_call.1} parent=39 // pred_fallthru
          _
      $region40: #{tpu_custom_call.1} parent=5 // pred_fallthru
        _
      %p524 = scmp.le.s32.totalorder 2, %s17
      // Predicated region
      $region49: #{tpu_custom_call.1} parent=5 // pred_check
        %p525 = pneg %p524
      $region50: #{tpu_custom_call.1} parent=5 // pred_check_branch
        %527 = sbr.rel (%p525) target = $region52
      $region51: #{tpu_custom_call.1} parent=5 // pred_region
        %s528 = ssub.s32 %s17, 2
        // Predicated region
        $region53: #{tpu_custom_call.1} parent=51 // pred_check
          %p529 = pneg %p156
        $region54: #{tpu_custom_call.1} parent=51 // pred_check_branch
          %531 = sbr.rel (%p529) target = $region56
        $region55: #{tpu_custom_call.1} parent=51 // pred_region
          %s532 = sand.u32 %s141, 1
          %s533 = scalar_lea.sflag [#allocation4], %s532
          %s534 = sand.u32 %s141, 1
          %s535 = smul.addr %s534, 128
          %s536 = scalar_lea.vmem [#allocation5], %s535
          %538 = dma.done %s533, 2048
        $region56: #{tpu_custom_call.1} parent=51 // pred_fallthru
          _
      $region52: #{tpu_custom_call.1} parent=5 // pred_fallthru
        _
    $region6: #{tpu_custom_call.1} parent=1 // loop_footer
      %s21 = sadd.s32 1, %s17
    $region7: #{tpu_custom_call.1} parent=1 // loop_footer_branch
      %16 = sbr.rel target = $region3
    $region8: #{tpu_custom_call.1} parent=1 // loop_exit
      _
    %539 = vsyncpa [#allocation3], 1
    %s540 = scalar_lea.sflag [#allocation3], 1
    %541 = vsyncpa %s540, 1
    %542 = vsyncpa [#allocation4], 1
    %s543 = scalar_lea.sflag [#allocation4], 1
    %544 = vsyncpa %s543, 1

</llo_original>
